<compile_context>
chip_gen: v5e
topology: v5e:2x2
jax: 0.10.0
libtpu: 0.0.40
codegen_flags: <defaults>
</compile_context>

<pallas_src>
import functools

import jax
import jax.numpy as jnp
from jax.experimental import pallas as pl
from jax.experimental.pallas import tpu as pltpu


def _cba_kernel(x_ref, w_ref, bias_ref, o_ref, patches_ref, *,
                kh_size, kw_size, cin, wpad, m_flat, m_seg, ips):
    """One grid step processes `ips` images with a single MXU matmul.

    x_ref       : (ips, Cin, Hpad*Wpad + KW-1)  VMEM, bf16 (flattened NCHW)
    w_ref       : (Cout_pad, KH*KW*Cin)         VMEM, bf16 (BN scale folded in)
    bias_ref    : (Cout_pad, 1)                 VMEM, f32  (folded BN bias)
    o_ref       : (ips, Cout_pad, m_seg)        VMEM, f32  (channel-major)
    patches_ref : (KH*KW*Cin, ips*m_seg)        VMEM scratch, bf16 (im2col^T)
    """
    # ---- transposed im2col with lane-dense writes (no casts, no reshapes) ----
    for img in range(ips):
        x2d = x_ref[img]                       # (Cin, flat_len) bf16, in vregs
        base = img * m_seg
        for kh in range(kh_size):
            for kw in range(kw_size):
                tap = kh * kw_size + kw
                off = kh * wpad + kw
                # One contiguous ~m_flat-lane slice covering all Cin planes.
                patches_ref[tap * cin:(tap + 1) * cin, base:base + m_flat] = (
                    x2d[:, off:off + m_flat])
        if m_seg > m_flat:
            # Only when several images share one dot: zero the small lane tail
            # so stale VMEM bits (possibly NaN) never enter the MXU.
            patches_ref[:, base + m_flat:base + m_seg] = jnp.zeros(
                (kh_size * kw_size * cin, m_seg - m_flat),
                dtype=patches_ref.dtype)

    # ---- single MXU matmul per step: bf16 operands, f32 accumulation ----
    acc = jnp.dot(w_ref[...], patches_ref[...],
                  preferred_element_type=jnp.float32)  # (Cout_pad, ips*m_seg)

    # ---- folded-BN bias + ReLU epilogue, lane-dense stores ----
    y = jnp.maximum(acc + bias_ref[...], 0.0)
    for img in range(ips):
        o_ref[img] = y[:, img * m_seg:(img + 1) * m_seg].astype(o_ref.dtype)


def _images_per_step(n):
    """Fold several images into one matmul M when the batch is large, but keep
    at least two grid blocks so both v7x TensorCores stay busy."""
    best = 1
    for d in range(1, min(n, 8) + 1):
        if n % d == 0 and n // d >= 2:
            best = d
    return best


def cba_module_forward(x_nchw, weight, gamma, beta, running_mean, running_var,
                       *, stride=1, padding=0, eps=1e-5):
    """Conv2d(bias=False) + BatchNorm2d(eval) + ReLU.  NCHW in, NCHW out."""
    n, cin, h, w = x_nchw.shape
    cout, cin_w, kh_size, kw_size = weight.shape
    assert cin == cin_w

    hpad, wpad = h + 2 * padding, w + 2 * padding
    ho = (hpad - kh_size) // stride + 1
    wo = (wpad - kw_size) // stride + 1
    ho1 = hpad - kh_size + 1                 # stride-1 rows computed in-kernel
    m_flat = ho1 * wpad                      # flattened per-image output grid
    kflat = kh_size * kw_size * cin
    c_pad = ((cout + 127) // 128) * 128
    flat_len = hpad * wpad + (kw_size - 1)   # +KW-1 keeps the last tap slice in bounds

    # ---- fold BN: scale into the weights, shift into a per-channel bias ----
    inv_std = jax.lax.rsqrt(running_var.astype(jnp.float32) + eps)
    scale = gamma.astype(jnp.float32) * inv_std
    bias = beta.astype(jnp.float32) - running_mean.astype(jnp.float32) * scale

    # Weight: (Cout, Cin, KH, KW) -> (Cout_pad, KH*KW*Cin), scale folded, bf16.
    w_flat = jnp.transpose(
        weight.astype(jnp.float32) * scale[:, None, None, None],
        (0, 2, 3, 1)).reshape(cout, kflat)
    w_flat = jnp.pad(w_flat, ((0, c_pad - cout), (0, 0))).astype(jnp.bfloat16)
    bias_col = jnp.pad(bias, (0, c_pad - cout)).reshape(c_pad, 1)

    # Input: keep NCHW (no transpose), pad spatially, flatten HW, cast bf16.
    x = x_nchw.astype(jnp.bfloat16)
    if padding > 0:
        x = jnp.pad(x, ((0, 0), (0, 0), (padding, padding), (padding, padding)))
    x_flat = x.reshape(n, cin, hpad * wpad)
    if kw_size > 1:
        x_flat = jnp.pad(x_flat, ((0, 0), (0, 0), (0, kw_size - 1)))

    ips = _images_per_step(n)
    # Per-image lane segment: exact when one image per dot, 128-aligned when
    # several images are folded so the per-image output slices stay aligned.
    m_seg = m_flat if ips == 1 else ((m_flat + 127) // 128) * 128

    kernel = functools.partial(
        _cba_kernel, kh_size=kh_size, kw_size=kw_size, cin=cin, wpad=wpad,
        m_flat=m_flat, m_seg=m_seg, ips=ips)

    # Per-step VMEM: 2*(ips*cin*flat_len*2B) + 2*(ips*c_pad*m_seg*4B)
    #              + kflat*ips*m_seg*2B + constants  ~= 0.3 MiB at toy sizes.
    # TODO(synk): add an M-tile grid axis when H/W grow so the footprint stays
    # well under v7x's 64 MiB VMEM while keeping >=256-row dot tiles.
    out = pl.pallas_call(
        kernel,
        out_shape=jax.ShapeDtypeStruct((n, c_pad, m_seg), jnp.float32),
        grid_spec=pltpu.PrefetchScalarGridSpec(
            num_scalar_prefetch=0,
            grid=(n // ips,),
            in_specs=[
                pl.BlockSpec((ips, cin, flat_len), lambda i: (i, 0, 0)),
                pl.BlockSpec((c_pad, kflat), lambda i: (0, 0)),
                pl.BlockSpec((c_pad, 1), lambda i: (0, 0)),
            ],
            out_specs=pl.BlockSpec((ips, c_pad, m_seg), lambda i: (i, 0, 0)),
            scratch_shapes=[pltpu.VMEM((kflat, ips * m_seg), jnp.bfloat16)],
        ),
        compiler_params=pltpu.CompilerParams(
            dimension_semantics=("parallel",),
            vmem_limit_bytes=32 * 1024 * 1024,
        ),
    )(x_flat, w_flat, bias_col)

    # Strip channel padding and wrapped/padded columns; output is already
    # channel-major (NCHW) so no transpose is needed.
    out = out[:, :cout, :m_flat].reshape(n, cout, ho1, wpad)
    if stride == 1:
        return out[:, :, :, :wo]
    # TODO(synk): stride>1 computes the stride-1 plane and subsamples here; an
    # in-kernel strided gather would avoid the ~stride^2 extra compute.
    return out[:, :, :(ho - 1) * stride + 1:stride,
               :(wo - 1) * stride + 1:stride]


def _reference(x_nchw, weight, gamma, beta, running_mean, running_var,
               *, stride=1, padding=0, eps=1e-5):
    """Pure-JAX reference mirroring the kernel numerics (bf16-rounded operands,
    BN scale folded into the weights, f32 accumulation)."""
    inv_std = jax.lax.rsqrt(running_var + eps)
    scale = gamma * inv_std
    bias = beta - running_mean * scale
    xq = x_nchw.astype(jnp.bfloat16).astype(jnp.float32)
    wq = (weight * scale[:, None, None, None]).astype(jnp.bfloat16).astype(jnp.float32)
    y = jax.lax.conv_general_dilated(
        xq, wq,
        window_strides=(stride, stride),
        padding=[(padding, padding), (padding, padding)],
        dimension_numbers=("NCHW", "OIHW", "NCHW"),
        precision=jax.lax.Precision.HIGHEST,
    )
    return jnp.maximum(y + bias[None, :, None, None], 0.0)


if __name__ == "__main__":
    # Module config (PyTorch defaults): out_channels=24, kernel_size=3,
    # stride=1, padding=0, bias=False.
    N, CIN, H, W = 2, 4, 16, 16
    COUT, K = 24, 3

    key = jax.random.PRNGKey(0)
    k_x, k_w, k_g, k_b, k_m, k_v = jax.random.split(key, 6)

    x = jax.random.normal(k_x, (N, CIN, H, W), dtype=jnp.float32)
    weight = jax.random.normal(k_w, (COUT, CIN, K, K), dtype=jnp.float32) * 0.1
    gamma = 1.0 + 0.1 * jax.random.normal(k_g, (COUT,), dtype=jnp.float32)
    beta = 0.1 * jax.random.normal(k_b, (COUT,), dtype=jnp.float32)
    running_mean = 0.1 * jax.random.normal(k_m, (COUT,), dtype=jnp.float32)
    running_var = jnp.abs(jax.random.normal(k_v, (COUT,), dtype=jnp.float32)) + 0.5

    fwd = jax.jit(functools.partial(cba_module_forward, stride=1, padding=0))
    out = fwd(x, weight, gamma, beta, running_mean, running_var)
    out = jax.block_until_ready(out)

    ref = _reference(x, weight, gamma, beta, running_mean, running_var,
                     stride=1, padding=0)
    assert out.shape == (N, COUT, H - K + 1, W - K + 1), out.shape
    err = float(jnp.max(jnp.abs(out - ref)))
    assert jnp.allclose(out, ref, atol=2e-3, rtol=2e-3), err

    print("KERNEL_OK")
</pallas_src>

<mosaic_0001>
module attributes {stable_mosaic.version = 11 : i64} {
  func.func @_cba_kernel(%arg0: i32, %arg1: memref<1x4x258xbf16, #tpu.memory_space<vmem>>, %arg2: memref<128x36xbf16, #tpu.memory_space<vmem>>, %arg3: memref<128x1xf32, #tpu.memory_space<vmem>>, %arg4: memref<1x128x224xf32, #tpu.memory_space<vmem>>, %arg5: memref<36x224xbf16, #tpu.memory_space<vmem>>) attributes {dimension_semantics = [#tpu.dimension_semantics<parallel>], iteration_bounds = array<i64: 2>, scalar_prefetch = 0 : i64, scratch_operands = 1 : i64, tpu.core_type = #tpu.core_type<tc>, window_params = [{transform_indices = @transform_0, window_bounds = array<i64: 1, 4, 258>}, {pipeline_mode = #tpu.pipeline_mode<synchronous>, transform_indices = @transform_1, window_bounds = array<i64: 128, 36>}, {pipeline_mode = #tpu.pipeline_mode<synchronous>, transform_indices = @transform_2, window_bounds = array<i64: 128, 1>}, {transform_indices = @transform_3, window_bounds = array<i64: 1, 128, 224>}]} {
    %c0 = arith.constant 0 : index
    %c0_0 = arith.constant 0 : index
    %c0_1 = arith.constant 0 : index
    %0 = vector.load %arg1[%c0, %c0_0, %c0_1] : memref<1x4x258xbf16, #tpu.memory_space<vmem>>, vector<1x4x258xbf16>
    %1 = vector.shape_cast %0 : vector<1x4x258xbf16> to vector<4x258xbf16>
    %2 = vector.extract_strided_slice %1 {offsets = [0, 0], sizes = [4, 224], strides = [1, 1]} : vector<4x258xbf16> to vector<4x224xbf16>
    %c0_2 = arith.constant 0 : index
    %c0_3 = arith.constant 0 : index
    %3 = vector.load %arg5[%c0_2, %c0_3] : memref<36x224xbf16, #tpu.memory_space<vmem>>, vector<4x224xbf16>
    tpu.vector_store %arg5[%c0_2, %c0_3], %2 {strides = array<i32>} : memref<36x224xbf16, #tpu.memory_space<vmem>>, vector<4x224xbf16>,
    %4 = vector.extract_strided_slice %1 {offsets = [0, 1], sizes = [4, 224], strides = [1, 1]} : vector<4x258xbf16> to vector<4x224xbf16>
    %c4 = arith.constant 4 : index
    %c0_4 = arith.constant 0 : index
    %5 = vector.load %arg5[%c4, %c0_4] : memref<36x224xbf16, #tpu.memory_space<vmem>>, vector<4x224xbf16>
    tpu.vector_store %arg5[%c4, %c0_4], %4 {strides = array<i32>} : memref<36x224xbf16, #tpu.memory_space<vmem>>, vector<4x224xbf16>,
    %6 = vector.extract_strided_slice %1 {offsets = [0, 2], sizes = [4, 224], strides = [1, 1]} : vector<4x258xbf16> to vector<4x224xbf16>
    %c8 = arith.constant 8 : index
    %c0_5 = arith.constant 0 : index
    %7 = vector.load %arg5[%c8, %c0_5] : memref<36x224xbf16, #tpu.memory_space<vmem>>, vector<4x224xbf16>
    tpu.vector_store %arg5[%c8, %c0_5], %6 {strides = array<i32>} : memref<36x224xbf16, #tpu.memory_space<vmem>>, vector<4x224xbf16>,
    %8 = vector.extract_strided_slice %1 {offsets = [0, 16], sizes = [4, 224], strides = [1, 1]} : vector<4x258xbf16> to vector<4x224xbf16>
    %c12 = arith.constant 12 : index
    %c0_6 = arith.constant 0 : index
    %9 = vector.load %arg5[%c12, %c0_6] : memref<36x224xbf16, #tpu.memory_space<vmem>>, vector<4x224xbf16>
    tpu.vector_store %arg5[%c12, %c0_6], %8 {strides = array<i32>} : memref<36x224xbf16, #tpu.memory_space<vmem>>, vector<4x224xbf16>,
    %10 = vector.extract_strided_slice %1 {offsets = [0, 17], sizes = [4, 224], strides = [1, 1]} : vector<4x258xbf16> to vector<4x224xbf16>
    %c16 = arith.constant 16 : index
    %c0_7 = arith.constant 0 : index
    %11 = vector.load %arg5[%c16, %c0_7] : memref<36x224xbf16, #tpu.memory_space<vmem>>, vector<4x224xbf16>
    tpu.vector_store %arg5[%c16, %c0_7], %10 {strides = array<i32>} : memref<36x224xbf16, #tpu.memory_space<vmem>>, vector<4x224xbf16>,
    %12 = vector.extract_strided_slice %1 {offsets = [0, 18], sizes = [4, 224], strides = [1, 1]} : vector<4x258xbf16> to vector<4x224xbf16>
    %c20 = arith.constant 20 : index
    %c0_8 = arith.constant 0 : index
    %13 = vector.load %arg5[%c20, %c0_8] : memref<36x224xbf16, #tpu.memory_space<vmem>>, vector<4x224xbf16>
    tpu.vector_store %arg5[%c20, %c0_8], %12 {strides = array<i32>} : memref<36x224xbf16, #tpu.memory_space<vmem>>, vector<4x224xbf16>,
    %14 = vector.extract_strided_slice %1 {offsets = [0, 32], sizes = [4, 224], strides = [1, 1]} : vector<4x258xbf16> to vector<4x224xbf16>
    %c24 = arith.constant 24 : index
    %c0_9 = arith.constant 0 : index
    %15 = vector.load %arg5[%c24, %c0_9] : memref<36x224xbf16, #tpu.memory_space<vmem>>, vector<4x224xbf16>
    tpu.vector_store %arg5[%c24, %c0_9], %14 {strides = array<i32>} : memref<36x224xbf16, #tpu.memory_space<vmem>>, vector<4x224xbf16>,
    %16 = vector.extract_strided_slice %1 {offsets = [0, 33], sizes = [4, 224], strides = [1, 1]} : vector<4x258xbf16> to vector<4x224xbf16>
    %c28 = arith.constant 28 : index
    %c0_10 = arith.constant 0 : index
    %17 = vector.load %arg5[%c28, %c0_10] : memref<36x224xbf16, #tpu.memory_space<vmem>>, vector<4x224xbf16>
    tpu.vector_store %arg5[%c28, %c0_10], %16 {strides = array<i32>} : memref<36x224xbf16, #tpu.memory_space<vmem>>, vector<4x224xbf16>,
    %18 = vector.extract_strided_slice %1 {offsets = [0, 34], sizes = [4, 224], strides = [1, 1]} : vector<4x258xbf16> to vector<4x224xbf16>
    %c32 = arith.constant 32 : index
    %c0_11 = arith.constant 0 : index
    %19 = vector.load %arg5[%c32, %c0_11] : memref<36x224xbf16, #tpu.memory_space<vmem>>, vector<4x224xbf16>
    tpu.vector_store %arg5[%c32, %c0_11], %18 {strides = array<i32>} : memref<36x224xbf16, #tpu.memory_space<vmem>>, vector<4x224xbf16>,
    %c0_12 = arith.constant 0 : index
    %c0_13 = arith.constant 0 : index
    %20 = vector.load %arg2[%c0_12, %c0_13] : memref<128x36xbf16, #tpu.memory_space<vmem>>, vector<128x36xbf16>
    %c0_14 = arith.constant 0 : index
    %c0_15 = arith.constant 0 : index
    %21 = vector.load %arg5[%c0_14, %c0_15] : memref<36x224xbf16, #tpu.memory_space<vmem>>, vector<36x224xbf16>
    %cst = arith.constant dense<0.000000e+00> : vector<128x224xf32>
    %22 = tpu.matmul %20, %21, %cst {dimension_numbers = #tpu.dot_dimension_numbers<[1], [0], [0], [1], [0, 0, 1, 1], [], []>} : vector<128x36xbf16>, vector<36x224xbf16>, vector<128x224xf32> -> vector<128x224xf32>
    %c0_16 = arith.constant 0 : index
    %c0_17 = arith.constant 0 : index
    %23 = vector.load %arg3[%c0_16, %c0_17] : memref<128x1xf32, #tpu.memory_space<vmem>>, vector<128x1xf32>
    %24 = vector.broadcast %23 : vector<128x1xf32> to vector<128x224xf32>
    %25 = arith.addf %22, %24 : vector<128x224xf32>
    %cst_18 = arith.constant 0.000000e+00 : f32
    %26 = vector.broadcast %cst_18 : f32 to vector<128x224xf32>
    %27 = arith.maximumf %25, %26 : vector<128x224xf32>
    %c0_19 = arith.constant 0 : index
    %c0_20 = arith.constant 0 : index
    %c0_21 = arith.constant 0 : index
    %28 = vector.load %arg4[%c0_19, %c0_20, %c0_21] : memref<1x128x224xf32, #tpu.memory_space<vmem>>, vector<1x128x224xf32>
    %29 = vector.shape_cast %28 : vector<1x128x224xf32> to vector<128x224xf32>
    %30 = vector.shape_cast %27 : vector<128x224xf32> to vector<1x128x224xf32>
    tpu.vector_store %arg4[%c0_19, %c0_20, %c0_21], %30 {strides = array<i32>} : memref<1x128x224xf32, #tpu.memory_space<vmem>>, vector<1x128x224xf32>,
    return
  }
  func.func @transform_0(%arg0: i32) -> (i32, i32, i32) {
    %c0_i32 = arith.constant 0 : i32
    %c0_i32_0 = arith.constant 0 : i32
    %c0_i32_1 = arith.constant 0 : i32
    return %arg0, %c0_i32, %c0_i32_0 : i32, i32, i32
  }
  func.func @transform_1(%arg0: i32) -> (i32, i32) {
    %c0_i32 = arith.constant 0 : i32
    %c0_i32_0 = arith.constant 0 : i32
    %c0_i32_1 = arith.constant 0 : i32
    return %c0_i32, %c0_i32_0 : i32, i32
  }
  func.func @transform_2(%arg0: i32) -> (i32, i32) {
    %c0_i32 = arith.constant 0 : i32
    %c0_i32_0 = arith.constant 0 : i32
    %c0_i32_1 = arith.constant 0 : i32
    return %c0_i32, %c0_i32_0 : i32, i32
  }
  func.func @transform_3(%arg0: i32) -> (i32, i32, i32) {
    %c0_i32 = arith.constant 0 : i32
    %c0_i32_0 = arith.constant 0 : i32
    %c0_i32_1 = arith.constant 0 : i32
    return %arg0, %c0_i32, %c0_i32_0 : i32, i32, i32
  }
}

</mosaic_0001>

<llo_original>
// kernel: cba_module_forward.1
$region0: #{cba_module_forward.1}
  #allocation0 [shape = 'u32[]', space=smem, size = 0x4, offset = 0x4, fixed_abs, tag = 'smem constant byte address 0x4 - core index']
  #allocation1 [shape = 'u32[72,128]{1,0:T(1,128)}', space=vmem, size = 0x9000, scoped, tag = 'internal scratch']
  #allocation2 [shape = 'bf16[36,224]{1,0:T(8,128)(2,1)}', space=vmem, size = 0x5000, scoped, tag = 'scratch operand']
  %s0 = inlined_call_operand.vmem [shape: bf16[2,4,258], index: 0, kind: input, shape index: {}]
  %s1 = inlined_call_operand.vmem [shape: bf16[128,36], index: 1, kind: input, shape index: {}]
  %s2 = inlined_call_operand.vmem [shape: f32[128,1], index: 2, kind: input, shape index: {}]
  %s3 = inlined_call_operand.vmem [shape: f32[2,128,224], index: 3, kind: output, shape index: {}]
  %s4 = sld [smem:[#allocation0]]
  $region45: #{cba_module_forward.1} parent=0
    _
  %s6 = ssub.s32 1, %s4
  %s7 = scalar_select 0, %s6, %s4
  loop: start=0, step=1, limit=4
  $region2: #{cba_module_forward.1} parent=0 // loop_pre_header
    _
  $region3: #{cba_module_forward.1} parent=0 // loop_header
    %s9 = sphi 0, %s13
    %p10 = scmp.ge.s32.totalorder %s9, 4
    %s19 = sphi 0, %s21
    %s22 = sphi 0, %s19
    %s23 = sphi 0, %s22
    %s39 = sphi 0, %s23
    %s43 = sphi 0, %s43
    %s45 = sphi 0, %s43
    %s46 = sphi 0, %s45
    %s60 = sphi 0, %s46
    %s64 = sphi 0, %s64
    %s66 = sphi 0, %s64
    %s67 = sphi 0, %s66
    %s81 = sphi 0, %s67
    %s87 = sphi 0, %s89
    %s90 = sphi 0, %s87
    %s91 = sphi 0, %s90
    %s107 = sphi 0, %s91
  $region4: #{cba_module_forward.1} parent=0 // loop_header_branch
    %12 = sbr.rel (%p10) target = $region8
  $region5: #{cba_module_forward.1} parent=0 // loop_body
    %s14 = ssub.s32 %s9, 1
    %s15 = ssub.s32 %s9, 2
    %s16 = sadd.s32 %s9, 1
    %s17 = ssub.s32 %s9, %s16
    %p18 = scmp.eq.s32.totalorder %s17, 0
    %s20 = sadd.s32 %s19, 1
    %s21 = scalar_select %p18, %s19, %s20
    %p24 = pneg %p18
    %p25 = scmp.eq.s32.totalorder %s9, 1
    %p26 = por %p24, %p25
    %p27 = scmp.ne.s32.totalorder %s19, %s22
    %p28 = scmp.eq.s32.totalorder %s9, 0
    %p29 = por %p27, %p28
    %p30 = scmp.ne.s32.totalorder %s19, %s22
    %p31 = scmp.eq.s32.totalorder %s14, 1
    %p32 = por %p30, %p31
    %p33 = scmp.ne.s32.totalorder %s22, %s23
    %p34 = scmp.eq.s32.totalorder %s14, 0
    %p35 = por %p33, %p34
    %p36 = scmp.ne.s32.totalorder %s22, %s23
    %p37 = scmp.eq.s32.totalorder %s15, 1
    %p38 = por %p36, %p37
    %p40 = scmp.ne.s32.totalorder %s23, %s39
    %p41 = scmp.eq.s32.totalorder %s15, 0
    %p42 = por %p40, %p41
    %s44 = sadd.s32 %s43, 1
    %p47 = scmp.eq.s32.totalorder %s9, 1
    %p48 = scmp.ne.s32.totalorder %s43, %s45
    %p49 = scmp.eq.s32.totalorder %s9, 0
    %p50 = por %p48, %p49
    %p51 = scmp.ne.s32.totalorder %s43, %s45
    %p52 = scmp.eq.s32.totalorder %s14, 1
    %p53 = por %p51, %p52
    %p54 = scmp.ne.s32.totalorder %s45, %s46
    %p55 = scmp.eq.s32.totalorder %s14, 0
    %p56 = por %p54, %p55
    %p57 = scmp.ne.s32.totalorder %s45, %s46
    %p58 = scmp.eq.s32.totalorder %s15, 1
    %p59 = por %p57, %p58
    %p61 = scmp.ne.s32.totalorder %s46, %s60
    %p62 = scmp.eq.s32.totalorder %s15, 0
    %p63 = por %p61, %p62
    %s65 = sadd.s32 %s64, 1
    %p68 = scmp.eq.s32.totalorder %s9, 1
    %p69 = scmp.ne.s32.totalorder %s64, %s66
    %p70 = scmp.eq.s32.totalorder %s9, 0
    %p71 = por %p69, %p70
    %p72 = scmp.ne.s32.totalorder %s64, %s66
    %p73 = scmp.eq.s32.totalorder %s14, 1
    %p74 = por %p72, %p73
    %p75 = scmp.ne.s32.totalorder %s66, %s67
    %p76 = scmp.eq.s32.totalorder %s14, 0
    %p77 = por %p75, %p76
    %p78 = scmp.ne.s32.totalorder %s66, %s67
    %p79 = scmp.eq.s32.totalorder %s15, 1
    %p80 = por %p78, %p79
    %p82 = scmp.ne.s32.totalorder %s67, %s81
    %p83 = scmp.eq.s32.totalorder %s15, 0
    %p84 = por %p82, %p83
    %s85 = ssub.s32 %s9, %s16
    %p86 = scmp.eq.s32.totalorder %s85, 0
    %s88 = sadd.s32 %s87, 1
    %s89 = scalar_select %p86, %s87, %s88
    %p92 = pneg %p86
    %p93 = scmp.eq.s32.totalorder %s9, 1
    %p94 = por %p92, %p93
    %p95 = scmp.ne.s32.totalorder %s87, %s90
    %p96 = scmp.eq.s32.totalorder %s9, 0
    %p97 = por %p95, %p96
    %p98 = scmp.ne.s32.totalorder %s87, %s90
    %p99 = scmp.eq.s32.totalorder %s14, 1
    %p100 = por %p98, %p99
    %p101 = scmp.ne.s32.totalorder %s90, %s91
    %p102 = scmp.eq.s32.totalorder %s14, 0
    %p103 = por %p101, %p102
    %p104 = scmp.ne.s32.totalorder %s90, %s91
    %p105 = scmp.eq.s32.totalorder %s15, 1
    %p106 = por %p104, %p105
    %p108 = scmp.ne.s32.totalorder %s91, %s107
    %p109 = scmp.eq.s32.totalorder %s15, 0
    %p110 = por %p108, %p109
    %p111 = scmp.le.s32.totalorder 1, %s9
    %p112 = scmp.lt.s32.totalorder %s9, 3
    %p113 = pnand %p111, %p112
    %p114 = pneg %p113
    // Predicated region
    $region9: #{cba_module_forward.1} parent=5 // pred_check
      _
    $region10: #{cba_module_forward.1} parent=5 // pred_check_branch
      %116 = sbr.rel (%p113) target = $region12
    $region11: #{cba_module_forward.1} parent=5 // pred_region
      %s117 = ssub.s32 %s9, 1
      // Predicated region
      $region13: #{cba_module_forward.1} parent=11 // pred_check
        %p118 = pneg %p56
      $region14: #{cba_module_forward.1} parent=11 // pred_check_branch
        %120 = sbr.rel (%p118) target = $region16
      $region15: #{cba_module_forward.1} parent=11 // pred_region
        _
      $region16: #{cba_module_forward.1} parent=11 // pred_fallthru
        _
      // Predicated region
      $region17: #{cba_module_forward.1} parent=11 // pred_check
        %p121 = pneg %p77
      $region18: #{cba_module_forward.1} parent=11 // pred_check_branch
        %123 = sbr.rel (%p121) target = $region20
      $region19: #{cba_module_forward.1} parent=11 // pred_region
        _
      $region20: #{cba_module_forward.1} parent=11 // pred_fallthru
        _
    $region12: #{cba_module_forward.1} parent=5 // pred_fallthru
      _
    %p124 = scmp.lt.s32.totalorder %s9, 2
    // Predicated region
    $region21: #{cba_module_forward.1} parent=5 // pred_check
      %p125 = pneg %p124
    $region22: #{cba_module_forward.1} parent=5 // pred_check_branch
      %127 = sbr.rel (%p125) target = $region24
    $region23: #{cba_module_forward.1} parent=5 // pred_region
      // Predicated region
      $region25: #{cba_module_forward.1} parent=23 // pred_check
        %p128 = pneg %p29
      $region26: #{cba_module_forward.1} parent=23 // pred_check_branch
        %130 = sbr.rel (%p128) target = $region28
      $region27: #{cba_module_forward.1} parent=23 // pred_region
        %p131 = scmp.lt.s32.totalorder %s9, 1
        %s132 = scalar_select %p131, %s9, 1
        %s133 = smul.addr %s132, 3
        %s134 = smul.addr %s133, 2
        %s135 = scalar_lea.vmem %s0, %s134
      $region28: #{cba_module_forward.1} parent=23 // pred_fallthru
        _
    $region24: #{cba_module_forward.1} parent=5 // pred_fallthru
      _
    %p136 = scmp.le.s32.totalorder 1, %s9
    %p137 = scmp.lt.s32.totalorder %s9, 3
    %p138 = pnand %p136, %p137
    %p139 = pneg %p138
    // Predicated region
    $region29: #{cba_module_forward.1} parent=5 // pred_check
      _
    $region30: #{cba_module_forward.1} parent=5 // pred_check_branch
      %141 = sbr.rel (%p138) target = $region32
    $region31: #{cba_module_forward.1} parent=5 // pred_region
      %s142 = ssub.s32 %s9, 1
      %p143 = scmp.lt.s32.totalorder %s14, 1
      %s144 = scalar_select %p143, %s14, 1
      %s145 = smul.addr %s144, 3
      %s146 = smul.addr %s145, 2
      %s147 = scalar_lea.vmem %s0, %s146
      %p148 = pneg %p35
      %p149 = pneg %p32
      %p150 = pneg %p56
      %p151 = pneg %p53
      %p152 = pneg %p77
      %p153 = pneg %p74
      %p154 = pneg %p103
      %p155 = pneg %p100
      %p156 = scmp.lt.s32.totalorder %s14, 1
      %s157 = scalar_select %p156, %s14, 1
      %s158 = smul.addr %s157, 32
      %s159 = smul.addr %s158, 8
      %s160 = scalar_lea.vmem %s3, %s159
      %p161 = scmp.lt.s32.totalorder %s14, 1
      %s162 = scalar_select %p161, %s14, 1
      %s163 = smul.addr %s162, 3
      %s164 = smul.addr %s163, 2
      %s165 = scalar_lea.vmem %s0, %s164
      %p166 = scmp.lt.s32.totalorder %s14, 1
      %s167 = scalar_select %p166, %s14, 1
      %s168 = smul.addr %s167, 32
      %s169 = smul.addr %s168, 8
      %s170 = scalar_lea.vmem %s3, %s169
      %v172 = vld [vmem:[%s165] sm:$0x3f]
      %174 = vst [vmem:[#allocation1] ss:$2 sm:$0xff] %v172
      %v175 = vld.sshfl [vmem:[#allocation1] sm:$0xff pattern:$0x75643120]
      %vm177 = vcmask 1041408
      %vm178 = vcmask 783364
      %vm179 = vmor %vm178, %vm177
      %180 = vst.msk [vmem:[#allocation2] sm:$0x33] %vm179, %v175
      %s181 = scalar_lea.vmem [#allocation1], 1
      %182 = vst [vmem:[%s181] ss:$2 sm:$0xff] %v172
      %v183 = vld.sshfl [vmem:[#allocation1] sm:$0xff pattern:$0x75643120]
      %185 = vrot.lane.b32.xlu0 %v183, 127
      %v186 = vpop.permute.xlu0 %185
      %v187 = vrot.slane %v186, 4
      %vm188 = vcmask 1039360
      %v189 = vsel %vm188, %v186, %v187
      %vm191 = vcmask 1043458
      %vm192 = vcmask 785414
      %vm193 = vmor %vm192, %vm191
      %194 = vst.msk [vmem:[#allocation2] sm:$0xcc] %vm193, %v189
      %195 = vst [vmem:[#allocation1] ss:$2 sm:$0xff] %v172
      %v196 = vld.sshfl [vmem:[#allocation1] sm:$0xff pattern:$0x75643120]
      %198 = vrot.lane.b32.xlu0 %v196, 126
      %v199 = vpop.permute.xlu0 %198
      %v200 = vrot.slane %v199, 4
      %vm201 = vcmask 1031168
      %v202 = vsel %vm201, %v199, %v200
      %204 = vst.msk [vmem:[#allocation2 + $0x8] sm:$0x33] %vm179, %v202
      %s205 = scalar_lea.vmem [#allocation1], 1
      %206 = vst [vmem:[%s205] ss:$2 sm:$0xff] %v172
      %v207 = vld.sshfl [vmem:[#allocation1] sm:$0xff pattern:$0x75643120]
      %209 = vrot.lane.b32.xlu0 %v207, 112
      %v210 = vpop.permute.xlu0 %209
      %v211 = vrot.slane %v210, 4
      %vm212 = vcmask 916480
      %v213 = vsel %vm212, %v210, %v211
      %215 = vst.msk [vmem:[#allocation2 + $0x8] sm:$0xcc] %vm193, %v213
      %216 = vst [vmem:[#allocation1] ss:$2 sm:$0xff] %v172
      %v217 = vld.sshfl [vmem:[#allocation1] sm:$0xff pattern:$0x75643120]
      %219 = vrot.lane.b32.xlu0 %v217, 111
      %v220 = vpop.permute.xlu0 %219
      %v221 = vrot.slane %v220, 4
      %vm222 = vcmask 908288
      %v223 = vsel %vm222, %v220, %v221
      %225 = vst.msk [vmem:[#allocation2 + $0x10] sm:$0x33] %vm179, %v223
      %s226 = scalar_lea.vmem [#allocation1], 1
      %227 = vst [vmem:[%s226] ss:$2 sm:$0xff] %v172
      %v228 = vld.sshfl [vmem:[#allocation1] sm:$0xff pattern:$0x75643120]
      %230 = vrot.lane.b32.xlu0 %v228, 110
      %v231 = vpop.permute.xlu0 %230
      %v232 = vrot.slane %v231, 4
      %vm233 = vcmask 900096
      %v234 = vsel %vm233, %v231, %v232
      %236 = vst.msk [vmem:[#allocation2 + $0x10] sm:$0xcc] %vm193, %v234
      %237 = vst [vmem:[#allocation1] ss:$2 sm:$0xff] %v172
      %v238 = vld.sshfl [vmem:[#allocation1] sm:$0xff pattern:$0x75643120]
      %240 = vrot.lane.b32.xlu0 %v238, 96
      %v241 = vpop.permute.xlu0 %240
      %v242 = vrot.slane %v241, 4
      %vm243 = vcmask 785408
      %v244 = vsel %vm243, %v241, %v242
      %246 = vst.msk [vmem:[#allocation2 + $0x18] sm:$0x33] %vm179, %v244
      %s247 = scalar_lea.vmem [#allocation1], 1
      %248 = vst [vmem:[%s247] ss:$2 sm:$0xff] %v172
      %v249 = vld.sshfl [vmem:[#allocation1] sm:$0xff pattern:$0x75643120]
      %v251 = vld.sshfl [vmem:[#allocation1 + $0x8] sm:$0xff pattern:$0x75643120]
      %253 = vrot.lane.b32.xlu0 %v249, 95
      %v254 = vpop.permute.xlu0 %253
      %255 = vrot.lane.b32.xlu0 %v251, 95
      %v256 = vpop.permute.xlu0 %255
      %v257 = vrot.slane %v254, 4
      %v258 = vrot.slane %v256, 4
      %vm259 = vcmask 1043456
      %v260 = vsel %vm259, %v257, %v258
      %vm261 = vcmask 777216
      %v262 = vsel %vm261, %v254, %v260
      %264 = vst.msk [vmem:[#allocation2 + $0x18] sm:$0xcc] %vm193, %v262
      %265 = vst [vmem:[#allocation1] ss:$2 sm:$0xff] %v172
      %v266 = vld.sshfl [vmem:[#allocation1] sm:$0xff pattern:$0x75643120]
      %v268 = vld.sshfl [vmem:[#allocation1 + $0x8] sm:$0xff pattern:$0x75643120]
      %270 = vrot.lane.b32.xlu0 %v266, 94
      %v271 = vpop.permute.xlu0 %270
      %272 = vrot.lane.b32.xlu0 %v268, 94
      %v273 = vpop.permute.xlu0 %272
      %v274 = vrot.slane %v271, 4
      %v275 = vrot.slane %v273, 4
      %v276 = vsel %vm259, %v274, %v275
      %vm277 = vcmask 769024
      %v278 = vsel %vm277, %v271, %v276
      %280 = vst.msk [vmem:[#allocation2 + $0x20] sm:$0x33] %vm179, %v278
      %v281 = vld [vmem:[%s1] sm:$0xf]
      %v282 = vld [vmem:[%s1 + $0x4] sm:$0xf]
      %v283 = vld [vmem:[%s1 + $0x8] sm:$0xf]
      %v284 = vld [vmem:[%s1 + $0xc] sm:$0xf]
      %v285 = vld [vmem:[%s1 + $0x10] sm:$0xf]
      %v286 = vld [vmem:[%s1 + $0x14] sm:$0xf]
      %v287 = vld [vmem:[%s1 + $0x18] sm:$0xf]
      %v288 = vld [vmem:[%s1 + $0x1c] sm:$0xf]
      %v289 = vld [vmem:[%s1 + $0x20] sm:$0xf]
      %v290 = vld [vmem:[%s1 + $0x24] sm:$0xf]
      %v291 = vld [vmem:[%s1 + $0x28] sm:$0xf]
      %v292 = vld [vmem:[%s1 + $0x2c] sm:$0xf]
      %v293 = vld [vmem:[%s1 + $0x30] sm:$0xf]
      %v294 = vld [vmem:[%s1 + $0x34] sm:$0xf]
      %v295 = vld [vmem:[%s1 + $0x38] sm:$0xf]
      %v296 = vld [vmem:[%s1 + $0x3c] sm:$0xf]
      %v297 = vld [vmem:[#allocation2] sm:$0xff]
      %v298 = vld [vmem:[#allocation2 + $0x8] sm:$0xff]
      %v299 = vld [vmem:[#allocation2 + $0x10] sm:$0xff]
      %v300 = vld [vmem:[#allocation2 + $0x18] sm:$0xff]
      %v301 = vld [vmem:[#allocation2 + $0x20] sm:$0x33]
      %v302 = vld [vmem:[%s2] sm:$0xff]
      %v303 = vld [vmem:[%s2 + $0x8] sm:$0xff]
      %v304 = vld [vmem:[%s2 + $0x10] sm:$0xff]
      %v305 = vld [vmem:[%s2 + $0x18] sm:$0xff]
      %v306 = vld [vmem:[%s2 + $0x20] sm:$0xff]
      %v307 = vld [vmem:[%s2 + $0x28] sm:$0xff]
      %v308 = vld [vmem:[%s2 + $0x30] sm:$0xff]
      %v309 = vld [vmem:[%s2 + $0x38] sm:$0xff]
      %v310 = vld [vmem:[%s2 + $0x40] sm:$0xff]
      %v311 = vld [vmem:[%s2 + $0x48] sm:$0xff]
      %v312 = vld [vmem:[%s2 + $0x50] sm:$0xff]
      %v313 = vld [vmem:[%s2 + $0x58] sm:$0xff]
      %v314 = vld [vmem:[%s2 + $0x60] sm:$0xff]
      %v315 = vld [vmem:[%s2 + $0x68] sm:$0xff]
      %v316 = vld [vmem:[%s2 + $0x70] sm:$0xff]
      %v317 = vld [vmem:[%s2 + $0x78] sm:$0xff]
      %319 = vset.pattern.permute.xlu0 0
      %320 = vperm.xlu0 %319, %v302
      %v321 = vpop.permute.xlu0 %320
      %324 = vset.pattern.permute.xlu0 0
      %325 = vperm.xlu0 %324, %v303
      %v326 = vpop.permute.xlu0 %325
      %329 = vset.pattern.permute.xlu0 0
      %330 = vperm.xlu0 %329, %v304
      %v331 = vpop.permute.xlu0 %330
      %334 = vset.pattern.permute.xlu0 0
      %335 = vperm.xlu0 %334, %v305
      %v336 = vpop.permute.xlu0 %335
      %339 = vset.pattern.permute.xlu0 0
      %340 = vperm.xlu0 %339, %v306
      %v341 = vpop.permute.xlu0 %340
      %344 = vset.pattern.permute.xlu0 0
      %345 = vperm.xlu0 %344, %v307
      %v346 = vpop.permute.xlu0 %345
      %349 = vset.pattern.permute.xlu0 0
      %350 = vperm.xlu0 %349, %v308
      %v351 = vpop.permute.xlu0 %350
      %354 = vset.pattern.permute.xlu0 0
      %355 = vperm.xlu0 %354, %v309
      %v356 = vpop.permute.xlu0 %355
      %359 = vset.pattern.permute.xlu0 0
      %360 = vperm.xlu0 %359, %v310
      %v361 = vpop.permute.xlu0 %360
      %364 = vset.pattern.permute.xlu0 0
      %365 = vperm.xlu0 %364, %v311
      %v366 = vpop.permute.xlu0 %365
      %369 = vset.pattern.permute.xlu0 0
      %370 = vperm.xlu0 %369, %v312
      %v371 = vpop.permute.xlu0 %370
      %374 = vset.pattern.permute.xlu0 0
      %375 = vperm.xlu0 %374, %v313
      %v376 = vpop.permute.xlu0 %375
      %379 = vset.pattern.permute.xlu0 0
      %380 = vperm.xlu0 %379, %v314
      %v381 = vpop.permute.xlu0 %380
      %384 = vset.pattern.permute.xlu0 0
      %385 = vperm.xlu0 %384, %v315
      %v386 = vpop.permute.xlu0 %385
      %389 = vset.pattern.permute.xlu0 0
      %390 = vperm.xlu0 %389, %v316
      %v391 = vpop.permute.xlu0 %390
      %394 = vset.pattern.permute.xlu0 0
      %395 = vperm.xlu0 %394, %v317
      %v396 = vpop.permute.xlu0 %395
      %v414 = vunpack.c.l.b16 %v281
      %v415 = vunpack.c.l.b16 %v282
      %v416 = vunpack.c.l.b16 %v283
      %v417 = vunpack.c.l.b16 %v284
      %v418 = vunpack.c.l.b16 %v285
      %v419 = vunpack.c.l.b16 %v286
      %v420 = vunpack.c.l.b16 %v287
      %v421 = vunpack.c.l.b16 %v288
      %v422 = vunpack.c.l.b16 %v289
      %v423 = vunpack.c.l.b16 %v290
      %v424 = vunpack.c.l.b16 %v291
      %v425 = vunpack.c.l.b16 %v292
      %v426 = vunpack.c.l.b16 %v293
      %v427 = vunpack.c.l.b16 %v294
      %v428 = vunpack.c.l.b16 %v295
      %v429 = vunpack.c.l.b16 %v296
      %v430 = vpack.c.b16 %v415, %v414
      %v431 = vpack.c.b16 %v417, %v416
      %v432 = vpack.c.b16 %v419, %v418
      %v433 = vpack.c.b16 %v421, %v420
      %v434 = vpack.c.b16 %v423, %v422
      %v435 = vpack.c.b16 %v425, %v424
      %v436 = vpack.c.b16 %v427, %v426
      %v437 = vpack.c.b16 %v429, %v428
      %v443 = vunpack.c.l.b16 %v297
      %v444 = vunpack.c.h.b16 %v297
      %v445 = vunpack.c.l.b16 %v298
      %v446 = vunpack.c.h.b16 %v298
      %v447 = vunpack.c.l.b16 %v299
      %v448 = vunpack.c.h.b16 %v299
      %v449 = vunpack.c.l.b16 %v300
      %v450 = vunpack.c.h.b16 %v300
      %v451 = vunpack.c.l.b16 %v301
      %v452 = vunpack.c.h.b16 %v301
      %v453 = vpack.c.b16 %v445, %v443
      %v454 = vpack.c.b16 %v446, %v444
      %v455 = vpack.c.b16 %v449, %v447
      %v456 = vpack.c.b16 %v450, %v448
      %v457 = vpack.c.b16 %v451, %v451
      %v458 = vpack.c.b16 %v452, %v452
      %vm463 = vcmask 293888
      %v465 = vsel %vm463, %v430, 0
      %v468 = vsel %vm463, %v431, 0
      %v471 = vsel %vm463, %v432, 0
      %v474 = vsel %vm463, %v433, 0
      %v477 = vsel %vm463, %v434, 0
      %v480 = vsel %vm463, %v435, 0
      %v483 = vsel %vm463, %v436, 0
      %v486 = vsel %vm463, %v437, 0
      %v489 = vsel %vm177, %v457, 0
      %v492 = vsel %vm177, %v458, 0
      %494 = vmatpush.bf16.msra.mxu0 0
      %495 = vmatpush.bf16.msra.mxu0 0
      %496 = vmatpush.bf16.msra.mxu0 0
      %497 = vmatpush.bf16.msra.mxu0 0
      %498 = vmatpush.bf16.msra.mxu0 0
      %499 = vmatpush.bf16.msra.mxu0 %v489
      %500 = vmatpush.bf16.msra.mxu0 %v455
      %501 = vmatpush.bf16.msra.mxu0 %v453
      %502 = vmatmul.bf16.gmra.mxu0 %v465
      %v503 = vpop.f32.mrf.mxu0
      %v504 = vadd.f32 %v321, %v503
      %v505 = vpop.f32.mrf.mxu0
      %v506 = vadd.f32 %v326, %v505
      %507 = vmatmul.bf16.gmra.mxu0 %v468
      %v508 = vpop.f32.mrf.mxu0
      %v509 = vadd.f32 %v331, %v508
      %v510 = vpop.f32.mrf.mxu0
      %v511 = vadd.f32 %v336, %v510
      %512 = vmatmul.bf16.gmra.mxu0 %v471
      %v513 = vpop.f32.mrf.mxu0
      %v514 = vadd.f32 %v341, %v513
      %v515 = vpop.f32.mrf.mxu0
      %v516 = vadd.f32 %v346, %v515
      %517 = vmatmul.bf16.gmra.mxu0 %v474
      %v518 = vpop.f32.mrf.mxu0
      %v519 = vadd.f32 %v351, %v518
      %v520 = vpop.f32.mrf.mxu0
      %v521 = vadd.f32 %v356, %v520
      %522 = vmatmul.bf16.gmra.mxu0 %v477
      %v523 = vpop.f32.mrf.mxu0
      %v524 = vadd.f32 %v361, %v523
      %v525 = vpop.f32.mrf.mxu0
      %v526 = vadd.f32 %v366, %v525
      %527 = vmatmul.bf16.gmra.mxu0 %v480
      %v528 = vpop.f32.mrf.mxu0
      %v529 = vadd.f32 %v371, %v528
      %v530 = vpop.f32.mrf.mxu0
      %v531 = vadd.f32 %v376, %v530
      %532 = vmatmul.bf16.gmra.mxu0 %v483
      %v533 = vpop.f32.mrf.mxu0
      %v534 = vadd.f32 %v381, %v533
      %v535 = vpop.f32.mrf.mxu0
      %v536 = vadd.f32 %v386, %v535
      %537 = vmatmul.bf16.gmra.mxu0 %v486
      %v538 = vpop.f32.mrf.mxu0
      %v539 = vadd.f32 %v391, %v538
      %v540 = vpop.f32.mrf.mxu0
      %v541 = vadd.f32 %v396, %v540
      %542 = vdwg.mxu0
      %543 = vmatpush.bf16.msra.mxu0 0
      %544 = vmatpush.bf16.msra.mxu0 0
      %545 = vmatpush.bf16.msra.mxu0 0
      %546 = vmatpush.bf16.msra.mxu0 0
      %547 = vmatpush.bf16.msra.mxu0 0
      %548 = vmatpush.bf16.msra.mxu0 %v492
      %549 = vmatpush.bf16.msra.mxu0 %v456
      %550 = vmatpush.bf16.msra.mxu0 %v454
      %551 = vmatmul.bf16.gmra.mxu0 %v465
      %v552 = vpop.f32.mrf.mxu0
      %v553 = vadd.f32 %v321, %v552
      %v554 = vpop.f32.mrf.mxu0
      %v555 = vadd.f32 %v326, %v554
      %556 = vmatmul.bf16.gmra.mxu0 %v468
      %v557 = vpop.f32.mrf.mxu0
      %v558 = vadd.f32 %v331, %v557
      %v559 = vpop.f32.mrf.mxu0
      %v560 = vadd.f32 %v336, %v559
      %561 = vmatmul.bf16.gmra.mxu0 %v471
      %v562 = vpop.f32.mrf.mxu0
      %v563 = vadd.f32 %v341, %v562
      %v564 = vpop.f32.mrf.mxu0
      %v565 = vadd.f32 %v346, %v564
      %566 = vmatmul.bf16.gmra.mxu0 %v474
      %v567 = vpop.f32.mrf.mxu0
      %v568 = vadd.f32 %v351, %v567
      %v569 = vpop.f32.mrf.mxu0
      %v570 = vadd.f32 %v356, %v569
      %571 = vmatmul.bf16.gmra.mxu0 %v477
      %v572 = vpop.f32.mrf.mxu0
      %v573 = vadd.f32 %v361, %v572
      %v574 = vpop.f32.mrf.mxu0
      %v575 = vadd.f32 %v366, %v574
      %576 = vmatmul.bf16.gmra.mxu0 %v480
      %v577 = vpop.f32.mrf.mxu0
      %v578 = vadd.f32 %v371, %v577
      %v579 = vpop.f32.mrf.mxu0
      %v580 = vadd.f32 %v376, %v579
      %581 = vmatmul.bf16.gmra.mxu0 %v483
      %v582 = vpop.f32.mrf.mxu0
      %v583 = vadd.f32 %v381, %v582
      %v584 = vpop.f32.mrf.mxu0
      %v585 = vadd.f32 %v386, %v584
      %586 = vmatmul.bf16.gmra.mxu0 %v486
      %v587 = vpop.f32.mrf.mxu0
      %v588 = vadd.f32 %v391, %v587
      %v589 = vpop.f32.mrf.mxu0
      %v590 = vadd.f32 %v396, %v589
      %591 = vdwg.mxu0
      %v592 = vmax.f32 %v504, 0.0
      %v593 = vmax.f32 %v553, 0.0
      %v594 = vmax.f32 %v506, 0.0
      %v595 = vmax.f32 %v555, 0.0
      %v596 = vmax.f32 %v509, 0.0
      %v597 = vmax.f32 %v558, 0.0
      %v598 = vmax.f32 %v511, 0.0
      %v599 = vmax.f32 %v560, 0.0
      %v600 = vmax.f32 %v514, 0.0
      %v601 = vmax.f32 %v563, 0.0
      %v602 = vmax.f32 %v516, 0.0
      %v603 = vmax.f32 %v565, 0.0
      %v604 = vmax.f32 %v519, 0.0
      %v605 = vmax.f32 %v568, 0.0
      %v606 = vmax.f32 %v521, 0.0
      %v607 = vmax.f32 %v570, 0.0
      %v608 = vmax.f32 %v524, 0.0
      %v609 = vmax.f32 %v573, 0.0
      %v610 = vmax.f32 %v526, 0.0
      %v611 = vmax.f32 %v575, 0.0
      %v612 = vmax.f32 %v529, 0.0
      %v613 = vmax.f32 %v578, 0.0
      %v614 = vmax.f32 %v531, 0.0
      %v615 = vmax.f32 %v580, 0.0
      %v616 = vmax.f32 %v534, 0.0
      %v617 = vmax.f32 %v583, 0.0
      %v618 = vmax.f32 %v536, 0.0
      %v619 = vmax.f32 %v585, 0.0
      %v620 = vmax.f32 %v539, 0.0
      %v621 = vmax.f32 %v588, 0.0
      %v622 = vmax.f32 %v541, 0.0
      %v623 = vmax.f32 %v590, 0.0
      %624 = vst [vmem:[%s170] sm:$0xff] %v592
      %vm625 = vcmask 785408
      %626 = vst.msk [vmem:[%s170 + $0x8] sm:$0xff] %vm625, %v593
      %627 = vst [vmem:[%s170 + $0x10] sm:$0xff] %v594
      %628 = vst.msk [vmem:[%s170 + $0x18] sm:$0xff] %vm625, %v595
      %629 = vst [vmem:[%s170 + $0x20] sm:$0xff] %v596
      %630 = vst.msk [vmem:[%s170 + $0x28] sm:$0xff] %vm625, %v597
      %631 = vst [vmem:[%s170 + $0x30] sm:$0xff] %v598
      %632 = vst.msk [vmem:[%s170 + $0x38] sm:$0xff] %vm625, %v599
      %633 = vst [vmem:[%s170 + $0x40] sm:$0xff] %v600
      %634 = vst.msk [vmem:[%s170 + $0x48] sm:$0xff] %vm625, %v601
      %635 = vst [vmem:[%s170 + $0x50] sm:$0xff] %v602
      %636 = vst.msk [vmem:[%s170 + $0x58] sm:$0xff] %vm625, %v603
      %637 = vst [vmem:[%s170 + $0x60] sm:$0xff] %v604
      %638 = vst.msk [vmem:[%s170 + $0x68] sm:$0xff] %vm625, %v605
      %639 = vst [vmem:[%s170 + $0x70] sm:$0xff] %v606
      %640 = vst.msk [vmem:[%s170 + $0x78] sm:$0xff] %vm625, %v607
      %641 = vst [vmem:[%s170 + $0x80] sm:$0xff] %v608
      %642 = vst.msk [vmem:[%s170 + $0x88] sm:$0xff] %vm625, %v609
      %643 = vst [vmem:[%s170 + $0x90] sm:$0xff] %v610
      %644 = vst.msk [vmem:[%s170 + $0x98] sm:$0xff] %vm625, %v611
      %645 = vst [vmem:[%s170 + $0xa0] sm:$0xff] %v612
      %646 = vst.msk [vmem:[%s170 + $0xa8] sm:$0xff] %vm625, %v613
      %647 = vst [vmem:[%s170 + $0xb0] sm:$0xff] %v614
      %648 = vst.msk [vmem:[%s170 + $0xb8] sm:$0xff] %vm625, %v615
      %649 = vst [vmem:[%s170 + $0xc0] sm:$0xff] %v616
      %650 = vst.msk [vmem:[%s170 + $0xc8] sm:$0xff] %vm625, %v617
      %651 = vst [vmem:[%s170 + $0xd0] sm:$0xff] %v618
      %652 = vst.msk [vmem:[%s170 + $0xd8] sm:$0xff] %vm625, %v619
      %653 = vst [vmem:[%s170 + $0xe0] sm:$0xff] %v620
      %654 = vst.msk [vmem:[%s170 + $0xe8] sm:$0xff] %vm625, %v621
      %655 = vst [vmem:[%s170 + $0xf0] sm:$0xff] %v622
      %656 = vst.msk [vmem:[%s170 + $0xf8] sm:$0xff] %vm625, %v623
      %p657 = scmp.lt.s32.totalorder %s14, 1
      %s658 = scalar_select %p657, %s14, 1
      %s659 = smul.addr %s658, 32
      %s660 = smul.addr %s659, 8
      %s661 = scalar_lea.vmem %s3, %s660
      // Predicated region
      $region33: #{cba_module_forward.1} parent=31 // pred_check
        %p662 = pneg %p100
      $region34: #{cba_module_forward.1} parent=31 // pred_check_branch
        %664 = sbr.rel (%p662) target = $region36
      $region35: #{cba_module_forward.1} parent=31 // pred_region
        _
      $region36: #{cba_module_forward.1} parent=31 // pred_fallthru
        _
    $region32: #{cba_module_forward.1} parent=5 // pred_fallthru
      _
    %p665 = scmp.le.s32.totalorder 2, %s9
    // Predicated region
    $region37: #{cba_module_forward.1} parent=5 // pred_check
      %p666 = pneg %p665
    $region38: #{cba_module_forward.1} parent=5 // pred_check_branch
      %668 = sbr.rel (%p666) target = $region40
    $region39: #{cba_module_forward.1} parent=5 // pred_region
      %s669 = ssub.s32 %s9, 2
      // Predicated region
      $region41: #{cba_module_forward.1} parent=39 // pred_check
        %p670 = pneg %p106
      $region42: #{cba_module_forward.1} parent=39 // pred_check_branch
        %672 = sbr.rel (%p670) target = $region44
      $region43: #{cba_module_forward.1} parent=39 // pred_region
        %p673 = scmp.lt.s32.totalorder %s15, 1
        %s674 = scalar_select %p673, %s15, 1
        %s675 = smul.addr %s674, 32
        %s676 = smul.addr %s675, 8
        %s677 = scalar_lea.vmem %s3, %s676
      $region44: #{cba_module_forward.1} parent=39 // pred_fallthru
        _
    $region40: #{cba_module_forward.1} parent=5 // pred_fallthru
      _
  $region6: #{cba_module_forward.1} parent=0 // loop_footer
    %s13 = sadd.s32 1, %s9
  $region7: #{cba_module_forward.1} parent=0 // loop_footer_branch
    %8 = sbr.rel target = $region3
  $region8: #{cba_module_forward.1} parent=0 // loop_exit
    _

</llo_original>
